<compile_context>
chip_gen: v7x
topology: tpu7x:2x2x1
jax: 0.10.0
libtpu: 0.0.40
codegen_flags: <defaults>
</compile_context>

<pallas_src>
import functools

import jax
import jax.numpy as jnp
from jax.experimental import pallas as pl
from jax.experimental.pallas import tpu as pltpu


# ----------------------------------------------------------------------------
# Kernel
# ----------------------------------------------------------------------------
def actor_critic_kernel(state_ref, action_ref,
                        w1_ref, b1_ref, w2_ref, b2_ref, w3_ref, b3_ref,
                        logp_ref, value_ref, ent_ref, *, action_dim):
    """One batch tile of the fused actor+critic MLP.

    state_ref : [TB, S]   f32 (cast to the MXU dtype in-kernel)
    action_ref: [TB, 1]   int32
    w1/w2/w3  : fused block-diagonal weights (compute dtype); b1/b2/b3 f32
    outputs   : logp_ref/value_ref/ent_ref, each [TB, 1] f32
    """
    cdt = w1_ref.dtype                                    # MXU input dtype
    x = state_ref[...].astype(cdt)                        # in-kernel cast (VPU)

    # fused 128-wide MLP: f32 MXU accumulation; activations in compute dtype
    # (bf16 tanh relieves the EUP on v6e/v7x; with cdt=f32 everything is f32).
    h = jnp.dot(x, w1_ref[...], preferred_element_type=jnp.float32) + b1_ref[...]
    h = jnp.tanh(h.astype(cdt))
    h = jnp.dot(h, w2_ref[...], preferred_element_type=jnp.float32) + b2_ref[...]
    h = jnp.tanh(h.astype(cdt))
    y = jnp.dot(h, w3_ref[...], preferred_element_type=jnp.float32) + b3_ref[...]
    # y: [TB, 128] f32, lanes [0, A) = actor logits, lane A = critic value.

    a = action_dim
    logits = y[:, :a]                                     # [TB, A]

    # numerically stable softmax / log-softmax (narrow lanes -> cheap EUP)
    m = jnp.max(logits, axis=-1, keepdims=True)
    z = logits - m
    e = jnp.exp(z)
    s = jnp.sum(e, axis=-1, keepdims=True)
    log_probs = z - jnp.log(s)                            # [TB, A]
    probs = e * (1.0 / s)                                 # exact divide on [TB,1]

    # gather log_prob(action) via a one-hot mask (no dynamic gather on TPU)
    # NOTE: out-of-range actions silently give logp=0 (assumed valid upstream).
    tb = logits.shape[0]
    col = jax.lax.broadcasted_iota(jnp.int32, (tb, a), 1)
    onehot = (col == action_ref[...]).astype(jnp.float32)

    logp_ref[...] = jnp.sum(onehot * log_probs, axis=-1, keepdims=True)
    ent_ref[...] = -jnp.sum(probs * log_probs, axis=-1, keepdims=True)

    # critic value lives at lane `action_dim` of the padded layer-3 output
    lane = jax.lax.broadcasted_iota(jnp.int32, y.shape, 1)
    value_ref[...] = jnp.sum(jnp.where(lane == a, y, 0.0), axis=-1, keepdims=True)


# ----------------------------------------------------------------------------
# Parameter init / prepack
# ----------------------------------------------------------------------------
def init_params(key, state_dim, action_dim, hidden=64):
    """PyTorch-style U(-1/sqrt(fan_in), +1/sqrt(fan_in)) init, unfused layout."""
    def linear(k, fan_in, fan_out):
        kw, kb = jax.random.split(k)
        bound = 1.0 / jnp.sqrt(fan_in)
        w = jax.random.uniform(kw, (fan_in, fan_out), jnp.float32, -bound, bound)
        b = jax.random.uniform(kb, (1, fan_out), jnp.float32, -bound, bound)
        return w, b

    ks = jax.random.split(key, 6)
    aw1, ab1 = linear(ks[0], state_dim, hidden)
    aw2, ab2 = linear(ks[1], hidden, hidden)
    aw3, ab3 = linear(ks[2], hidden, action_dim)
    cw1, cb1 = linear(ks[3], state_dim, hidden)
    cw2, cb2 = linear(ks[4], hidden, hidden)
    cw3, cb3 = linear(ks[5], hidden, 1)
    return (aw1, ab1, aw2, ab2, aw3, ab3, cw1, cb1, cw2, cb2, cw3, cb3)


def _round_up(x, m):
    return (x + m - 1) // m * m


def _cdiv(a, b):
    return (a + b - 1) // b


def prepack_params(params, compute_dtype=jnp.bfloat16):
    """Fuse actor/critic into one 128-wide MLP (block-diagonal weights).

    Done once outside the kernel.  Weights are cast to the MXU input dtype;
    biases stay f32 (added after the f32-accumulated matmul).  The final layer
    is zero-padded to 128 output lanes: lanes [0, A) = actor logits, lane A =
    critic value, remaining lanes are zero.
    """
    (aw1, ab1, aw2, ab2, aw3, ab3, cw1, cb1, cw2, cb2, cw3, cb3) = params
    h = aw1.shape[1]
    a = aw3.shape[1]
    n_out = _round_up(a + 1, 128)                                # lane-dense layer 3

    w1 = jnp.concatenate([aw1, cw1], axis=1)                     # [S, 2H]
    b1 = jnp.concatenate([ab1, cb1], axis=1)                     # [1, 2H]

    w2 = jnp.zeros((2 * h, 2 * h), jnp.float32)
    w2 = w2.at[:h, :h].set(aw2).at[h:, h:].set(cw2)              # block-diag [2H, 2H]
    b2 = jnp.concatenate([ab2, cb2], axis=1)                     # [1, 2H]

    w3 = jnp.zeros((2 * h, n_out), jnp.float32)
    w3 = w3.at[:h, :a].set(aw3).at[h:, a:a + 1].set(cw3)         # [2H, 128]
    b3 = jnp.zeros((1, n_out), jnp.float32)
    b3 = b3.at[:, :a].set(ab3).at[:, a:a + 1].set(cb3)           # [1, 128]

    return (w1.astype(compute_dtype), b1,
            w2.astype(compute_dtype), b2,
            w3.astype(compute_dtype), b3)


def _choose_tiling(bsz, block_b):
    """Pick (tb, n_tiles, b_pad): big tiles, >=2 tiles for v7x megacore, and
    minimal padding (avoid a full jnp.pad copy whenever possible)."""
    b8 = _round_up(bsz, 8)                   # sublane rounding only
    n_tiles = max(_cdiv(b8, block_b), 1)
    if b8 >= 16:
        n_tiles = max(n_tiles, 2)            # let v7x shard the batch across 2 TCs
    # prefer an even tile count when it does not increase padding
    if n_tiles > 1 and n_tiles % 2 == 1:
        n_even = n_tiles + 1
        pad_even = _round_up(_cdiv(b8, n_even), 8) * n_even
        pad_odd = _round_up(_cdiv(b8, n_tiles), 8) * n_tiles
        if pad_even <= pad_odd:
            n_tiles = n_even
    tb = _round_up(_cdiv(b8, n_tiles), 8)
    b_pad = n_tiles * tb
    return tb, n_tiles, b_pad


# ----------------------------------------------------------------------------
# Host wrapper
# ----------------------------------------------------------------------------
@functools.partial(jax.jit, static_argnames=("action_dim", "block_b"))
def actor_critic_evaluate(state, action, fused_params, *, action_dim,
                          block_b=2048):
    """state: [B, S] f32; action: [B] int.
    Returns (action_logprobs [B], state_values [B,1], dist_entropy [B])."""
    w1, b1, w2, b2, w3, b3 = fused_params
    bsz, s_dim = state.shape
    h2 = w1.shape[1]            # 2*hidden (=128)
    n3 = w3.shape[1]            # padded layer-3 width (=128)

    tb, n_tiles, b_pad = _choose_tiling(bsz, block_b)

    x = state                                       # stays f32; cast in-kernel
    act2d = action.astype(jnp.int32).reshape(-1, 1)
    if b_pad != bsz:                                # only when unavoidable
        x = jnp.pad(x, ((0, b_pad - bsz), (0, 0)))
        act2d = jnp.pad(act2d, ((0, b_pad - bsz), (0, 0)))

    out_shape = (
        jax.ShapeDtypeStruct((b_pad, 1), jnp.float32),   # log-prob
        jax.ShapeDtypeStruct((b_pad, 1), jnp.float32),   # value
        jax.ShapeDtypeStruct((b_pad, 1), jnp.float32),   # entropy
    )

    in_specs = [
        pl.BlockSpec((tb, s_dim), lambda i: (i, 0)),     # state  (tiled over batch)
        pl.BlockSpec((tb, 1), lambda i: (i, 0)),         # action (tiled over batch)
        pl.BlockSpec((s_dim, h2), lambda i: (0, 0)),     # w1 (VMEM-resident)
        pl.BlockSpec((1, h2), lambda i: (0, 0)),         # b1
        pl.BlockSpec((h2, h2), lambda i: (0, 0)),        # w2
        pl.BlockSpec((1, h2), lambda i: (0, 0)),         # b2
        pl.BlockSpec((h2, n3), lambda i: (0, 0)),        # w3
        pl.BlockSpec((1, n3), lambda i: (0, 0)),         # b3
    ]
    out_specs = (
        pl.BlockSpec((tb, 1), lambda i: (i, 0)),
        pl.BlockSpec((tb, 1), lambda i: (i, 0)),
        pl.BlockSpec((tb, 1), lambda i: (i, 0)),
    )

    w_itemsize = jnp.dtype(w1.dtype).itemsize
    flops = 2 * b_pad * (s_dim * h2 + h2 * h2 + h2 * n3)
    transcendentals = b_pad * (2 * h2 + action_dim + 2)     # tanh, exp, log, div
    bytes_accessed = (b_pad * s_dim * 4 + b_pad * 4
                      + (s_dim * h2 + h2 * h2 + h2 * n3) * w_itemsize
                      + (2 * h2 + n3) * 4
                      + 3 * b_pad * 4)

    logp2d, val2d, ent2d = pl.pallas_call(
        functools.partial(actor_critic_kernel, action_dim=action_dim),
        out_shape=out_shape,
        grid=(n_tiles,),
        in_specs=in_specs,
        out_specs=out_specs,
        compiler_params=pltpu.CompilerParams(
            dimension_semantics=("parallel",),      # megacore: split batch tiles
        ),
        cost_estimate=pl.CostEstimate(
            flops=flops,
            transcendentals=transcendentals,
            bytes_accessed=bytes_accessed,
        ),
    )(x, act2d, w1, b1, w2, b2, w3, b3)

    logp = logp2d[:bsz, 0]
    value = val2d[:bsz]
    ent = ent2d[:bsz, 0]
    return logp, value, ent


# ----------------------------------------------------------------------------
# Plain-JAX reference (mirrors the PyTorch module)
# ----------------------------------------------------------------------------
def _reference(state, action, params):
    (aw1, ab1, aw2, ab2, aw3, ab3, cw1, cb1, cw2, cb2, cw3, cb3) = params
    h = jnp.tanh(state @ aw1 + ab1)
    h = jnp.tanh(h @ aw2 + ab2)
    logits = h @ aw3 + ab3
    logp_all = jax.nn.log_softmax(logits, axis=-1)
    probs = jax.nn.softmax(logits, axis=-1)
    lp = jnp.take_along_axis(logp_all, action[:, None].astype(jnp.int32), axis=-1)[:, 0]
    ent = -jnp.sum(probs * logp_all, axis=-1)
    g = jnp.tanh(state @ cw1 + cb1)
    g = jnp.tanh(g @ cw2 + cb2)
    val = g @ cw3 + cb3
    return lp, val, ent


# ----------------------------------------------------------------------------
# Self-test
# ----------------------------------------------------------------------------
if __name__ == "__main__":
    STATE_DIM, ACTION_DIM = 32, 8

    key = jax.random.PRNGKey(0)
    k_params, k_state, k_act = jax.random.split(key, 3)

    params = init_params(k_params, STATE_DIM, ACTION_DIM)

    def run_case(batch, block_b, compute_dtype, rtol, atol):
        ks, ka = jax.random.split(jax.random.fold_in(k_state, batch))
        state = jax.random.normal(ks, (batch, STATE_DIM), jnp.float32)
        action = jax.random.randint(ka, (batch,), 0, ACTION_DIM, jnp.int32)

        fused = prepack_params(params, compute_dtype=compute_dtype)
        logp, value, ent = actor_critic_evaluate(
            state, action, fused, action_dim=ACTION_DIM, block_b=block_b)
        jax.block_until_ready((logp, value, ent))

        with jax.default_matmul_precision("highest"):
            r_logp, r_value, r_ent = _reference(state, action, params)

        assert logp.shape == (batch,) and value.shape == (batch, 1) and ent.shape == (batch,)
        assert jnp.allclose(logp, r_logp, rtol=rtol, atol=atol), (logp, r_logp)
        assert jnp.allclose(value, r_value, rtol=rtol, atol=atol), (value, r_value)
        assert jnp.allclose(ent, r_ent, rtol=rtol, atol=atol), (ent, r_ent)

    # tiny batch, single tile, f32 compute path
    run_case(batch=8, block_b=2048, compute_dtype=jnp.float32, rtol=1e-2, atol=1e-2)

    # multi-tile grid with padding (B=20 -> 3 tiles of 8), bf16 MXU + bf16 tanh
    run_case(batch=20, block_b=8, compute_dtype=jnp.bfloat16, rtol=1e-1, atol=5e-2)

    # default config: forces >=2 tiles (megacore path) with small residual padding
    run_case(batch=300, block_b=2048, compute_dtype=jnp.bfloat16, rtol=1e-1, atol=5e-2)

    print("KERNEL_OK")
</pallas_src>

<mosaic_0001>
module attributes {stable_mosaic.version = 11 : i64} {
  func.func @actor_critic_kernel(%arg0: i32, %arg1: memref<8x32xf32, #tpu.memory_space<vmem>>, %arg2: memref<8x1xi32, #tpu.memory_space<vmem>>, %arg3: memref<32x128xf32, #tpu.memory_space<vmem>>, %arg4: memref<1x128xf32, #tpu.memory_space<vmem>>, %arg5: memref<128x128xf32, #tpu.memory_space<vmem>>, %arg6: memref<1x128xf32, #tpu.memory_space<vmem>>, %arg7: memref<128x128xf32, #tpu.memory_space<vmem>>, %arg8: memref<1x128xf32, #tpu.memory_space<vmem>>, %arg9: memref<8x1xf32, #tpu.memory_space<vmem>>, %arg10: memref<8x1xf32, #tpu.memory_space<vmem>>, %arg11: memref<8x1xf32, #tpu.memory_space<vmem>>) attributes {dimension_semantics = [#tpu.dimension_semantics<parallel>], iteration_bounds = array<i64: 1>, scalar_prefetch = 0 : i64, scratch_operands = 0 : i64, tpu.core_type = #tpu.core_type<tc>, window_params = [{transform_indices = @transform_0, window_bounds = array<i64: 8, 32>}, {transform_indices = @transform_1, window_bounds = array<i64: 8, 1>}, {pipeline_mode = #tpu.pipeline_mode<synchronous>, transform_indices = @transform_2, window_bounds = array<i64: 32, 128>}, {pipeline_mode = #tpu.pipeline_mode<synchronous>, transform_indices = @transform_3, window_bounds = array<i64: 1, 128>}, {pipeline_mode = #tpu.pipeline_mode<synchronous>, transform_indices = @transform_4, window_bounds = array<i64: 128, 128>}, {pipeline_mode = #tpu.pipeline_mode<synchronous>, transform_indices = @transform_5, window_bounds = array<i64: 1, 128>}, {pipeline_mode = #tpu.pipeline_mode<synchronous>, transform_indices = @transform_6, window_bounds = array<i64: 128, 128>}, {pipeline_mode = #tpu.pipeline_mode<synchronous>, transform_indices = @transform_7, window_bounds = array<i64: 1, 128>}, {transform_indices = @transform_8, window_bounds = array<i64: 8, 1>}, {transform_indices = @transform_9, window_bounds = array<i64: 8, 1>}, {transform_indices = @transform_10, window_bounds = array<i64: 8, 1>}]} {
    %c0 = arith.constant 0 : index
    %c0_0 = arith.constant 0 : index
    %0 = vector.load %arg1[%c0, %c0_0] : memref<8x32xf32, #tpu.memory_space<vmem>>, vector<8x32xf32>
    %c0_1 = arith.constant 0 : index
    %c0_2 = arith.constant 0 : index
    %1 = vector.load %arg3[%c0_1, %c0_2] : memref<32x128xf32, #tpu.memory_space<vmem>>, vector<32x128xf32>
    %cst = arith.constant dense<0.000000e+00> : vector<8x128xf32>
    %2 = tpu.matmul %0, %1, %cst {dimension_numbers = #tpu.dot_dimension_numbers<[1], [0], [0], [1], [0, 0, 1, 1], [], []>} : vector<8x32xf32>, vector<32x128xf32>, vector<8x128xf32> -> vector<8x128xf32>
    %c0_3 = arith.constant 0 : index
    %c0_4 = arith.constant 0 : index
    %3 = vector.load %arg4[%c0_3, %c0_4] : memref<1x128xf32, #tpu.memory_space<vmem>>, vector<1x128xf32>
    %4 = vector.broadcast %3 : vector<1x128xf32> to vector<8x128xf32>
    %5 = arith.addf %2, %4 : vector<8x128xf32>
    %6 = math.tanh %5 : vector<8x128xf32>
    %c0_5 = arith.constant 0 : index
    %c0_6 = arith.constant 0 : index
    %7 = vector.load %arg5[%c0_5, %c0_6] : memref<128x128xf32, #tpu.memory_space<vmem>>, vector<128x128xf32>
    %cst_7 = arith.constant dense<0.000000e+00> : vector<8x128xf32>
    %8 = tpu.matmul %6, %7, %cst_7 {dimension_numbers = #tpu.dot_dimension_numbers<[1], [0], [0], [1], [0, 0, 1, 1], [], []>} : vector<8x128xf32>, vector<128x128xf32>, vector<8x128xf32> -> vector<8x128xf32>
    %c0_8 = arith.constant 0 : index
    %c0_9 = arith.constant 0 : index
    %9 = vector.load %arg6[%c0_8, %c0_9] : memref<1x128xf32, #tpu.memory_space<vmem>>, vector<1x128xf32>
    %10 = vector.broadcast %9 : vector<1x128xf32> to vector<8x128xf32>
    %11 = arith.addf %8, %10 : vector<8x128xf32>
    %12 = math.tanh %11 : vector<8x128xf32>
    %c0_10 = arith.constant 0 : index
    %c0_11 = arith.constant 0 : index
    %13 = vector.load %arg7[%c0_10, %c0_11] : memref<128x128xf32, #tpu.memory_space<vmem>>, vector<128x128xf32>
    %cst_12 = arith.constant dense<0.000000e+00> : vector<8x128xf32>
    %14 = tpu.matmul %12, %13, %cst_12 {dimension_numbers = #tpu.dot_dimension_numbers<[1], [0], [0], [1], [0, 0, 1, 1], [], []>} : vector<8x128xf32>, vector<128x128xf32>, vector<8x128xf32> -> vector<8x128xf32>
    %c0_13 = arith.constant 0 : index
    %c0_14 = arith.constant 0 : index
    %15 = vector.load %arg8[%c0_13, %c0_14] : memref<1x128xf32, #tpu.memory_space<vmem>>, vector<1x128xf32>
    %16 = vector.broadcast %15 : vector<1x128xf32> to vector<8x128xf32>
    %17 = arith.addf %14, %16 : vector<8x128xf32>
    %18 = vector.extract_strided_slice %17 {offsets = [0, 0], sizes = [8, 8], strides = [1, 1]} : vector<8x128xf32> to vector<8x8xf32>
    %cst_15 = arith.constant dense<0xFF800000> : vector<8xf32>
    %19 = vector.multi_reduction <maximumf>, %18, %cst_15 [1] : vector<8x8xf32> to vector<8xf32>
    %20 = vector.shape_cast %19 : vector<8xf32> to vector<8x1xf32>
    %21 = vector.broadcast %20 : vector<8x1xf32> to vector<8x8xf32>
    %22 = arith.subf %18, %21 : vector<8x8xf32>
    %23 = math.exp %22 : vector<8x8xf32>
    %cst_16 = arith.constant dense<0.000000e+00> : vector<8xf32>
    %24 = vector.multi_reduction <add>, %23, %cst_16 [1] : vector<8x8xf32> to vector<8xf32>
    %25 = vector.shape_cast %24 : vector<8xf32> to vector<8x1xf32>
    %26 = math.log %25 : vector<8x1xf32>
    %27 = vector.broadcast %26 : vector<8x1xf32> to vector<8x8xf32>
    %28 = arith.subf %22, %27 : vector<8x8xf32>
    %cst_17 = arith.constant 1.000000e+00 : f32
    %29 = vector.broadcast %cst_17 : f32 to vector<8x1xf32>
    %30 = arith.divf %29, %25 : vector<8x1xf32>
    %31 = vector.broadcast %30 : vector<8x1xf32> to vector<8x8xf32>
    %32 = arith.mulf %23, %31 : vector<8x8xf32>
    %33 = tpu.iota {dimensions = array<i32: 1>} : vector<8x8xi32>
    %c0_18 = arith.constant 0 : index
    %c0_19 = arith.constant 0 : index
    %34 = vector.load %arg2[%c0_18, %c0_19] : memref<8x1xi32, #tpu.memory_space<vmem>>, vector<8x1xi32>
    %35 = vector.broadcast %34 : vector<8x1xi32> to vector<8x8xi32>
    %36 = arith.cmpi eq, %33, %35 : vector<8x8xi32>
    %37 = arith.extui %36 : vector<8x8xi1> to vector<8x8xi32>
    %38 = arith.sitofp %37 : vector<8x8xi32> to vector<8x8xf32>
    %39 = arith.mulf %38, %28 : vector<8x8xf32>
    %cst_20 = arith.constant dense<0.000000e+00> : vector<8xf32>
    %40 = vector.multi_reduction <add>, %39, %cst_20 [1] : vector<8x8xf32> to vector<8xf32>
    %41 = vector.shape_cast %40 : vector<8xf32> to vector<8x1xf32>
    %c0_21 = arith.constant 0 : index
    %c0_22 = arith.constant 0 : index
    %42 = vector.load %arg9[%c0_21, %c0_22] : memref<8x1xf32, #tpu.memory_space<vmem>>, vector<8x1xf32>
    tpu.vector_store %arg9[%c0_21, %c0_22], %41 {strides = array<i32>} : memref<8x1xf32, #tpu.memory_space<vmem>>, vector<8x1xf32>,
    %43 = arith.mulf %32, %28 : vector<8x8xf32>
    %cst_23 = arith.constant dense<0.000000e+00> : vector<8xf32>
    %44 = vector.multi_reduction <add>, %43, %cst_23 [1] : vector<8x8xf32> to vector<8xf32>
    %45 = vector.shape_cast %44 : vector<8xf32> to vector<8x1xf32>
    %cst_24 = arith.constant 0.000000e+00 : f32
    %46 = vector.broadcast %cst_24 : f32 to vector<8x1xf32>
    %47 = arith.subf %46, %45 : vector<8x1xf32>
    %c0_25 = arith.constant 0 : index
    %c0_26 = arith.constant 0 : index
    %48 = vector.load %arg11[%c0_25, %c0_26] : memref<8x1xf32, #tpu.memory_space<vmem>>, vector<8x1xf32>
    tpu.vector_store %arg11[%c0_25, %c0_26], %47 {strides = array<i32>} : memref<8x1xf32, #tpu.memory_space<vmem>>, vector<8x1xf32>,
    %49 = tpu.iota {dimensions = array<i32: 1>} : vector<8x128xi32>
    %c8_i32 = arith.constant 8 : i32
    %50 = vector.broadcast %c8_i32 : i32 to vector<8x128xi32>
    %51 = arith.cmpi eq, %49, %50 : vector<8x128xi32>
    %cst_27 = arith.constant 0.000000e+00 : f32
    %52 = vector.broadcast %cst_27 : f32 to vector<8x128xf32>
    %53 = arith.select %51, %17, %52 : vector<8x128xi1>, vector<8x128xf32>
    %cst_28 = arith.constant dense<0.000000e+00> : vector<8xf32>
    %54 = vector.multi_reduction <add>, %53, %cst_28 [1] : vector<8x128xf32> to vector<8xf32>
    %55 = vector.shape_cast %54 : vector<8xf32> to vector<8x1xf32>
    %c0_29 = arith.constant 0 : index
    %c0_30 = arith.constant 0 : index
    %56 = vector.load %arg10[%c0_29, %c0_30] : memref<8x1xf32, #tpu.memory_space<vmem>>, vector<8x1xf32>
    tpu.vector_store %arg10[%c0_29, %c0_30], %55 {strides = array<i32>} : memref<8x1xf32, #tpu.memory_space<vmem>>, vector<8x1xf32>,
    return
  }
  func.func @transform_0(%arg0: i32) -> (i32, i32) {
    %c0_i32 = arith.constant 0 : i32
    %c0_i32_0 = arith.constant 0 : i32
    return %arg0, %c0_i32 : i32, i32
  }
  func.func @transform_1(%arg0: i32) -> (i32, i32) {
    %c0_i32 = arith.constant 0 : i32
    %c0_i32_0 = arith.constant 0 : i32
    return %arg0, %c0_i32 : i32, i32
  }
  func.func @transform_2(%arg0: i32) -> (i32, i32) {
    %c0_i32 = arith.constant 0 : i32
    %c0_i32_0 = arith.constant 0 : i32
    %c0_i32_1 = arith.constant 0 : i32
    return %c0_i32, %c0_i32_0 : i32, i32
  }
  func.func @transform_3(%arg0: i32) -> (i32, i32) {
    %c0_i32 = arith.constant 0 : i32
    %c0_i32_0 = arith.constant 0 : i32
    %c0_i32_1 = arith.constant 0 : i32
    return %c0_i32, %c0_i32_0 : i32, i32
  }
  func.func @transform_4(%arg0: i32) -> (i32, i32) {
    %c0_i32 = arith.constant 0 : i32
    %c0_i32_0 = arith.constant 0 : i32
    %c0_i32_1 = arith.constant 0 : i32
    return %c0_i32, %c0_i32_0 : i32, i32
  }
  func.func @transform_5(%arg0: i32) -> (i32, i32) {
    %c0_i32 = arith.constant 0 : i32
    %c0_i32_0 = arith.constant 0 : i32
    %c0_i32_1 = arith.constant 0 : i32
    return %c0_i32, %c0_i32_0 : i32, i32
  }
  func.func @transform_6(%arg0: i32) -> (i32, i32) {
    %c0_i32 = arith.constant 0 : i32
    %c0_i32_0 = arith.constant 0 : i32
    %c0_i32_1 = arith.constant 0 : i32
    return %c0_i32, %c0_i32_0 : i32, i32
  }
  func.func @transform_7(%arg0: i32) -> (i32, i32) {
    %c0_i32 = arith.constant 0 : i32
    %c0_i32_0 = arith.constant 0 : i32
    %c0_i32_1 = arith.constant 0 : i32
    return %c0_i32, %c0_i32_0 : i32, i32
  }
  func.func @transform_8(%arg0: i32) -> (i32, i32) {
    %c0_i32 = arith.constant 0 : i32
    %c0_i32_0 = arith.constant 0 : i32
    return %arg0, %c0_i32 : i32, i32
  }
  func.func @transform_9(%arg0: i32) -> (i32, i32) {
    %c0_i32 = arith.constant 0 : i32
    %c0_i32_0 = arith.constant 0 : i32
    return %arg0, %c0_i32 : i32, i32
  }
  func.func @transform_10(%arg0: i32) -> (i32, i32) {
    %c0_i32 = arith.constant 0 : i32
    %c0_i32_0 = arith.constant 0 : i32
    return %arg0, %c0_i32 : i32, i32
  }
}

</mosaic_0001>

<llo_original>
// kernel: actor_critic_evaluate.1
$region0: #{actor_critic_evaluate.1}
  #allocation0 [shape = 'u32[]', space=smem, size = 0x4, offset = 0x4, fixed_abs, tag = 'smem constant byte address 0x4 - core index']
  #allocation1 [shape = 'u32[144,128]{1,0:T(1,128)}', space=vmem, size = 0x12000, scoped, tag = 'internal scratch']
  %s0 = inlined_call_operand.vmem [shape: f32[8,32], index: 0, kind: input, shape index: {}]
  %s1 = inlined_call_operand.vmem [shape: s32[8,1], index: 1, kind: input, shape index: {}]
  %s2 = inlined_call_operand.hbm [shape: f32[32,128], index: 2, kind: input, shape index: {}]
  %s3 = inlined_call_operand.vmem [shape: f32[1,128], index: 3, kind: input, shape index: {}]
  %s4 = inlined_call_operand.hbm [shape: f32[128,128], index: 4, kind: input, shape index: {}]
  %s5 = inlined_call_operand.vmem [shape: f32[1,128], index: 5, kind: input, shape index: {}]
  %s6 = inlined_call_operand.hbm [shape: f32[128,128], index: 6, kind: input, shape index: {}]
  %s7 = inlined_call_operand.vmem [shape: f32[1,128], index: 7, kind: input, shape index: {}]
  %s8 = inlined_call_operand.vmem [shape: f32[8,1], index: 8, kind: output, shape index: {0}]
  %s9 = inlined_call_operand.vmem [shape: f32[8,1], index: 9, kind: output, shape index: {1}]
  %s10 = inlined_call_operand.vmem [shape: f32[8,1], index: 10, kind: output, shape index: {2}]
  %11 = xla_tuple %s8, %s9, %s10
  %s12 = sld [smem:[#allocation0]]
  $region70: #{actor_critic_evaluate.1} parent=0
    _
  %s14 = ssub.s32 1, %s12
  %s15 = scalar_select 0, %s14, %s12
  $region1: #{actor_critic_evaluate.1} parent=0
    #allocation2 [shape = 'u8[16384]{0}', space=vmem, size = 0x4000, scoped, tag = 'input window, operand 2, single buffered']
    #allocation3 [shape = 's32[1]{0}', space=sflag, size = 0x4, scoped, tag = 'scoped memory for actor_critic_evaluate.1']
    #allocation4 [shape = 'u8[65536]{0}', space=vmem, size = 0x10000, scoped, tag = 'input window, operand 4, single buffered']
    #allocation5 [shape = 's32[1]{0}', space=sflag, size = 0x4, scoped, tag = 'scoped memory for actor_critic_evaluate.1']
    #allocation6 [shape = 'u8[65536]{0}', space=vmem, size = 0x10000, scoped, tag = 'input window, operand 6, single buffered']
    %16 = vsyncpa [#allocation3], 0
    %17 = vsyncpa [#allocation5], 0
    // Predicated region
    $region2: #{actor_critic_evaluate.1} parent=1 // pred_check
      _
    $region3: #{actor_critic_evaluate.1} parent=1 // pred_check_branch
      %19 = sbr.rel (0) target = $region5
    $region4: #{actor_critic_evaluate.1} parent=1 // pred_region
      _
    $region5: #{actor_critic_evaluate.1} parent=1 // pred_fallthru
      _
    // Predicated region
    $region6: #{actor_critic_evaluate.1} parent=1 // pred_check
      _
    $region7: #{actor_critic_evaluate.1} parent=1 // pred_check_branch
      %21 = sbr.rel (0) target = $region9
    $region8: #{actor_critic_evaluate.1} parent=1 // pred_region
      _
    $region9: #{actor_critic_evaluate.1} parent=1 // pred_fallthru
      _
    // Predicated region
    $region10: #{actor_critic_evaluate.1} parent=1 // pred_check
      _
    $region11: #{actor_critic_evaluate.1} parent=1 // pred_check_branch
      %23 = sbr.rel (0) target = $region13
    $region12: #{actor_critic_evaluate.1} parent=1 // pred_region
      %s25 = ssub.s32 512, 512
      %26 = vsyncadd [#allocation3], %s25
      %s27 = sshll.u32 [#allocation2], 4
      %s28 = int_to_ptr.vmem [resolvable:$true] %s27
      %33 = dma.hbm_to_vmem [thread:$0]  %s2, 512, %s28, [#allocation3], 128, 128, 8
    $region13: #{actor_critic_evaluate.1} parent=1 // pred_fallthru
      _
    // Predicated region
    $region14: #{actor_critic_evaluate.1} parent=1 // pred_check
      _
    $region15: #{actor_critic_evaluate.1} parent=1 // pred_check_branch
      %35 = sbr.rel (0) target = $region17
    $region16: #{actor_critic_evaluate.1} parent=1 // pred_region
      _
    $region17: #{actor_critic_evaluate.1} parent=1 // pred_fallthru
      _
    // Predicated region
    $region18: #{actor_critic_evaluate.1} parent=1 // pred_check
      _
    $region19: #{actor_critic_evaluate.1} parent=1 // pred_check_branch
      %37 = sbr.rel (0) target = $region21
    $region20: #{actor_critic_evaluate.1} parent=1 // pred_region
      %s39 = ssub.s32 2048, 2048
      %40 = vsyncadd [#allocation5], %s39
      %s41 = sshll.u32 [#allocation4], 4
      %s42 = int_to_ptr.vmem [resolvable:$true] %s41
      %47 = dma.hbm_to_vmem [thread:$0]  %s4, 2048, %s42, [#allocation5], 128, 128, 8
    $region21: #{actor_critic_evaluate.1} parent=1 // pred_fallthru
      _
    // Predicated region
    $region22: #{actor_critic_evaluate.1} parent=1 // pred_check
      _
    $region23: #{actor_critic_evaluate.1} parent=1 // pred_check_branch
      %49 = sbr.rel (0) target = $region25
    $region24: #{actor_critic_evaluate.1} parent=1 // pred_region
      _
    $region25: #{actor_critic_evaluate.1} parent=1 // pred_fallthru
      _
    // Predicated region
    $region26: #{actor_critic_evaluate.1} parent=1 // pred_check
      _
    $region27: #{actor_critic_evaluate.1} parent=1 // pred_check_branch
      %51 = sbr.rel (0) target = $region29
    $region28: #{actor_critic_evaluate.1} parent=1 // pred_region
      %s53 = ssub.s32 2048, 2048
      %54 = vsyncadd [#allocation5], %s53
      %s55 = sshll.u32 [#allocation6], 4
      %s56 = int_to_ptr.vmem [resolvable:$true] %s55
      %61 = dma.hbm_to_vmem [thread:$0]  %s6, 2048, %s56, [#allocation5], 128, 128, 8
    $region29: #{actor_critic_evaluate.1} parent=1 // pred_fallthru
      _
    // Predicated region
    $region30: #{actor_critic_evaluate.1} parent=1 // pred_check
      _
    $region31: #{actor_critic_evaluate.1} parent=1 // pred_check_branch
      %63 = sbr.rel (0) target = $region33
    $region32: #{actor_critic_evaluate.1} parent=1 // pred_region
      _
    $region33: #{actor_critic_evaluate.1} parent=1 // pred_fallthru
      _
    // Predicated region
    $region34: #{actor_critic_evaluate.1} parent=1 // pred_check
      _
    $region35: #{actor_critic_evaluate.1} parent=1 // pred_check_branch
      %65 = sbr.rel (0) target = $region37
    $region36: #{actor_critic_evaluate.1} parent=1 // pred_region
      %66 = dma.done [#allocation3], 512
    $region37: #{actor_critic_evaluate.1} parent=1 // pred_fallthru
      _
    // Predicated region
    $region38: #{actor_critic_evaluate.1} parent=1 // pred_check
      _
    $region39: #{actor_critic_evaluate.1} parent=1 // pred_check_branch
      %68 = sbr.rel (0) target = $region41
    $region40: #{actor_critic_evaluate.1} parent=1 // pred_region
      %69 = dma.done [#allocation5], 2048
    $region41: #{actor_critic_evaluate.1} parent=1 // pred_fallthru
      _
    // Predicated region
    $region42: #{actor_critic_evaluate.1} parent=1 // pred_check
      _
    $region43: #{actor_critic_evaluate.1} parent=1 // pred_check_branch
      %71 = sbr.rel (0) target = $region45
    $region44: #{actor_critic_evaluate.1} parent=1 // pred_region
      %72 = dma.done [#allocation5], 2048
    $region45: #{actor_critic_evaluate.1} parent=1 // pred_fallthru
      _
    %v73 = vld [vmem:[%s0] sm:$0xff]
    %v74 = vld [vmem:[#allocation2] sm:$0xff]
    %v75 = vld [vmem:[#allocation2 + $0x8] sm:$0xff]
    %v76 = vld [vmem:[#allocation2 + $0x10] sm:$0xff]
    %v77 = vld [vmem:[#allocation2 + $0x18] sm:$0xff]
    %v78 = vld [vmem:[%s3] sm:$0x1]
    %v80 = vlaneseq
    %v81 = vshrl.u32 %v80, 7
    %v82 = vsub.s32 0, %v81
    %v83 = vrot.slane %v78, %v82
    %vm85 = vcmask 261120
    %v87 = vsel %vm85, %v73, 0
    %89 = vmatprep.subr.mxu0 0.0
    %90 = vmatpush1.msra.mxu0 %v74
    %91 = vmatprep.subr.mxu0 0.0
    %92 = vmatpush1.msra.mxu0 %v75
    %93 = vmatprep.subr.mxu0 0.0
    %94 = vmatpush1.msra.mxu0 %v76
    %95 = vmatprep.subr.mxu0 0.0
    %96 = vmatpush1.msra.mxu0 %v77
    %97 = vmatprep.subr.mxu0 0.0
    %98 = vmatpush1.msra.mxu0 0.0
    %99 = vmatprep.subr.mxu0 0.0
    %100 = vmatpush1.msra.mxu0 0.0
    %101 = vmatprep.subr.mxu0 0.0
    %102 = vmatpush1.msra.mxu0 0.0
    %103 = vmatprep.subr.mxu0 0.0
    %104 = vmatpush1.msra.mxu0 0.0
    %105 = vmatprep.subr.mxu0 0.0
    %106 = vmatpush1.msra.mxu0 0.0
    %107 = vmatprep.subr.mxu0 0.0
    %108 = vmatpush1.msra.mxu0 0.0
    %109 = vmatprep.subr.mxu0 0.0
    %110 = vmatpush1.msra.mxu0 0.0
    %111 = vmatprep.subr.mxu0 0.0
    %112 = vmatpush1.msra.mxu0 0.0
    %113 = vmatprep.subr.mxu0 0.0
    %114 = vmatpush1.msra.mxu0 0.0
    %115 = vmatprep.subr.mxu0 0.0
    %116 = vmatpush1.msra.mxu0 0.0
    %117 = vmatprep.subr.mxu0 0.0
    %118 = vmatpush1.msra.mxu0 0.0
    %119 = vmatprep.subr.mxu0 0.0
    %120 = vmatpush1.msra.mxu0 0.0
    %121 = vmatprep.subr.mxu0 0.0
    %122 = vmatpush1.msra.mxu0 0.0
    %123 = vmatprep.subr.mxu0 0.0
    %124 = vmatpush1.msra.mxu0 0.0
    %125 = vmatprep.subr.mxu0 0.0
    %126 = vmatpush1.msra.mxu0 0.0
    %127 = vmatprep.subr.mxu0 0.0
    %128 = vmatpush1.msra.mxu0 0.0
    %129 = vmatprep.subr.mxu0 0.0
    %130 = vmatpush1.msra.mxu0 0.0
    %131 = vmatprep.subr.mxu0 0.0
    %132 = vmatpush1.msra.mxu0 0.0
    %133 = vmatprep.subr.mxu0 0.0
    %134 = vmatpush1.msra.mxu0 0.0
    %135 = vmatprep.subr.mxu0 0.0
    %136 = vmatpush1.msra.mxu0 0.0
    %137 = vmatprep.subr.mxu0 0.0
    %138 = vmatpush1.msra.mxu0 0.0
    %139 = vmatprep.subr.mxu0 0.0
    %140 = vmatpush1.msra.mxu0 0.0
    %141 = vmatprep.subr.mxu0 0.0
    %142 = vmatpush1.msra.mxu0 0.0
    %143 = vmatprep.subr.mxu0 0.0
    %144 = vmatpush1.msra.mxu0 0.0
    %145 = vmatprep.subr.mxu0 0.0
    %146 = vmatpush1.msra.mxu0 0.0
    %147 = vmatprep.subr.mxu0 0.0
    %148 = vmatpush1.msra.mxu0 0.0
    %149 = vmatprep.subr.mxu0 0.0
    %150 = vmatpush1.msra.mxu0 0.0
    %151 = vmatprep.subr.mxu0 0.0
    %152 = vmatpush1.msra.mxu0 0.0
    %153 = vmatprep.mubr.f32.mxu0 0.0
    %154 = vmatmul.mubr.f32.gmra.mrb[0].mxu0 %v87
    %v155 = vpop.f32.mrb[0].mxu0
    %v156 = vadd.f32 %v83, %v155
    %v157 = vpop.f32.mrb[0].mxu0
    %158 = vdwg.mxu0
    %v159 = vtanh.pop %v156
    %v160 = vld [vmem:[#allocation4] sm:$0xff]
    %v161 = vld [vmem:[#allocation4 + $0x8] sm:$0xff]
    %v162 = vld [vmem:[#allocation4 + $0x10] sm:$0xff]
    %v163 = vld [vmem:[#allocation4 + $0x18] sm:$0xff]
    %v164 = vld [vmem:[#allocation4 + $0x20] sm:$0xff]
    %v165 = vld [vmem:[#allocation4 + $0x28] sm:$0xff]
    %v166 = vld [vmem:[#allocation4 + $0x30] sm:$0xff]
    %v167 = vld [vmem:[#allocation4 + $0x38] sm:$0xff]
    %v168 = vld [vmem:[#allocation4 + $0x40] sm:$0xff]
    %v169 = vld [vmem:[#allocation4 + $0x48] sm:$0xff]
    %v170 = vld [vmem:[#allocation4 + $0x50] sm:$0xff]
    %v171 = vld [vmem:[#allocation4 + $0x58] sm:$0xff]
    %v172 = vld [vmem:[#allocation4 + $0x60] sm:$0xff]
    %v173 = vld [vmem:[#allocation4 + $0x68] sm:$0xff]
    %v174 = vld [vmem:[#allocation4 + $0x70] sm:$0xff]
    %v175 = vld [vmem:[#allocation4 + $0x78] sm:$0xff]
    %v176 = vld [vmem:[%s5] sm:$0x1]
    %v178 = vlaneseq
    %v179 = vshrl.u32 %v178, 7
    %v180 = vsub.s32 0, %v179
    %v181 = vrot.slane %v176, %v180
    %183 = vmatprep.subr.mxu0 0.0
    %184 = vmatpush1.msra.mxu0 %v160
    %185 = vmatprep.subr.mxu0 0.0
    %186 = vmatpush1.msra.mxu0 %v161
    %187 = vmatprep.subr.mxu0 0.0
    %188 = vmatpush1.msra.mxu0 %v162
    %189 = vmatprep.subr.mxu0 0.0
    %190 = vmatpush1.msra.mxu0 %v163
    %191 = vmatprep.subr.mxu0 0.0
    %192 = vmatpush1.msra.mxu0 %v164
    %193 = vmatprep.subr.mxu0 0.0
    %194 = vmatpush1.msra.mxu0 %v165
    %195 = vmatprep.subr.mxu0 0.0
    %196 = vmatpush1.msra.mxu0 %v166
    %197 = vmatprep.subr.mxu0 0.0
    %198 = vmatpush1.msra.mxu0 %v167
    %199 = vmatprep.subr.mxu0 0.0
    %200 = vmatpush1.msra.mxu0 %v168
    %201 = vmatprep.subr.mxu0 0.0
    %202 = vmatpush1.msra.mxu0 %v169
    %203 = vmatprep.subr.mxu0 0.0
    %204 = vmatpush1.msra.mxu0 %v170
    %205 = vmatprep.subr.mxu0 0.0
    %206 = vmatpush1.msra.mxu0 %v171
    %207 = vmatprep.subr.mxu0 0.0
    %208 = vmatpush1.msra.mxu0 %v172
    %209 = vmatprep.subr.mxu0 0.0
    %210 = vmatpush1.msra.mxu0 %v173
    %211 = vmatprep.subr.mxu0 0.0
    %212 = vmatpush1.msra.mxu0 %v174
    %213 = vmatprep.subr.mxu0 0.0
    %214 = vmatpush1.msra.mxu0 %v175
    %215 = vmatprep.subr.mxu0 0.0
    %216 = vmatpush1.msra.mxu0 0.0
    %217 = vmatprep.subr.mxu0 0.0
    %218 = vmatpush1.msra.mxu0 0.0
    %219 = vmatprep.subr.mxu0 0.0
    %220 = vmatpush1.msra.mxu0 0.0
    %221 = vmatprep.subr.mxu0 0.0
    %222 = vmatpush1.msra.mxu0 0.0
    %223 = vmatprep.subr.mxu0 0.0
    %224 = vmatpush1.msra.mxu0 0.0
    %225 = vmatprep.subr.mxu0 0.0
    %226 = vmatpush1.msra.mxu0 0.0
    %227 = vmatprep.subr.mxu0 0.0
    %228 = vmatpush1.msra.mxu0 0.0
    %229 = vmatprep.subr.mxu0 0.0
    %230 = vmatpush1.msra.mxu0 0.0
    %231 = vmatprep.subr.mxu0 0.0
    %232 = vmatpush1.msra.mxu0 0.0
    %233 = vmatprep.subr.mxu0 0.0
    %234 = vmatpush1.msra.mxu0 0.0
    %235 = vmatprep.subr.mxu0 0.0
    %236 = vmatpush1.msra.mxu0 0.0
    %237 = vmatprep.subr.mxu0 0.0
    %238 = vmatpush1.msra.mxu0 0.0
    %239 = vmatprep.subr.mxu0 0.0
    %240 = vmatpush1.msra.mxu0 0.0
    %241 = vmatprep.subr.mxu0 0.0
    %242 = vmatpush1.msra.mxu0 0.0
    %243 = vmatprep.subr.mxu0 0.0
    %244 = vmatpush1.msra.mxu0 0.0
    %245 = vmatprep.subr.mxu0 0.0
    %246 = vmatpush1.msra.mxu0 0.0
    %247 = vmatprep.mubr.f32.mxu0 0.0
    %248 = vmatmul.mubr.f32.gmra.mrb[0].mxu0 %v159
    %v249 = vpop.f32.mrb[0].mxu0
    %v250 = vadd.f32 %v181, %v249
    %v251 = vpop.f32.mrb[0].mxu0
    %252 = vdwg.mxu0
    %v253 = vtanh.pop %v250
    %v254 = vld [vmem:[#allocation6] sm:$0xff]
    %v255 = vld [vmem:[#allocation6 + $0x8] sm:$0xff]
    %v256 = vld [vmem:[#allocation6 + $0x10] sm:$0xff]
    %v257 = vld [vmem:[#allocation6 + $0x18] sm:$0xff]
    %v258 = vld [vmem:[#allocation6 + $0x20] sm:$0xff]
    %v259 = vld [vmem:[#allocation6 + $0x28] sm:$0xff]
    %v260 = vld [vmem:[#allocation6 + $0x30] sm:$0xff]
    %v261 = vld [vmem:[#allocation6 + $0x38] sm:$0xff]
    %v262 = vld [vmem:[#allocation6 + $0x40] sm:$0xff]
    %v263 = vld [vmem:[#allocation6 + $0x48] sm:$0xff]
    %v264 = vld [vmem:[#allocation6 + $0x50] sm:$0xff]
    %v265 = vld [vmem:[#allocation6 + $0x58] sm:$0xff]
    %v266 = vld [vmem:[#allocation6 + $0x60] sm:$0xff]
    %v267 = vld [vmem:[#allocation6 + $0x68] sm:$0xff]
    %v268 = vld [vmem:[#allocation6 + $0x70] sm:$0xff]
    %v269 = vld [vmem:[#allocation6 + $0x78] sm:$0xff]
    %v270 = vld [vmem:[%s7] sm:$0x1]
    %v272 = vlaneseq
    %v273 = vshrl.u32 %v272, 7
    %v274 = vsub.s32 0, %v273
    %v275 = vrot.slane %v270, %v274
    %277 = vmatprep.subr.mxu0 0.0
    %278 = vmatpush1.msra.mxu0 %v254
    %279 = vmatprep.subr.mxu0 0.0
    %280 = vmatpush1.msra.mxu0 %v255
    %281 = vmatprep.subr.mxu0 0.0
    %282 = vmatpush1.msra.mxu0 %v256
    %283 = vmatprep.subr.mxu0 0.0
    %284 = vmatpush1.msra.mxu0 %v257
    %285 = vmatprep.subr.mxu0 0.0
    %286 = vmatpush1.msra.mxu0 %v258
    %287 = vmatprep.subr.mxu0 0.0
    %288 = vmatpush1.msra.mxu0 %v259
    %289 = vmatprep.subr.mxu0 0.0
    %290 = vmatpush1.msra.mxu0 %v260
    %291 = vmatprep.subr.mxu0 0.0
    %292 = vmatpush1.msra.mxu0 %v261
    %293 = vmatprep.subr.mxu0 0.0
    %294 = vmatpush1.msra.mxu0 %v262
    %295 = vmatprep.subr.mxu0 0.0
    %296 = vmatpush1.msra.mxu0 %v263
    %297 = vmatprep.subr.mxu0 0.0
    %298 = vmatpush1.msra.mxu0 %v264
    %299 = vmatprep.subr.mxu0 0.0
    %300 = vmatpush1.msra.mxu0 %v265
    %301 = vmatprep.subr.mxu0 0.0
    %302 = vmatpush1.msra.mxu0 %v266
    %303 = vmatprep.subr.mxu0 0.0
    %304 = vmatpush1.msra.mxu0 %v267
    %305 = vmatprep.subr.mxu0 0.0
    %306 = vmatpush1.msra.mxu0 %v268
    %307 = vmatprep.subr.mxu0 0.0
    %308 = vmatpush1.msra.mxu0 %v269
    %309 = vmatprep.subr.mxu0 0.0
    %310 = vmatpush1.msra.mxu0 0.0
    %311 = vmatprep.subr.mxu0 0.0
    %312 = vmatpush1.msra.mxu0 0.0
    %313 = vmatprep.subr.mxu0 0.0
    %314 = vmatpush1.msra.mxu0 0.0
    %315 = vmatprep.subr.mxu0 0.0
    %316 = vmatpush1.msra.mxu0 0.0
    %317 = vmatprep.subr.mxu0 0.0
    %318 = vmatpush1.msra.mxu0 0.0
    %319 = vmatprep.subr.mxu0 0.0
    %320 = vmatpush1.msra.mxu0 0.0
    %321 = vmatprep.subr.mxu0 0.0
    %322 = vmatpush1.msra.mxu0 0.0
    %323 = vmatprep.subr.mxu0 0.0
    %324 = vmatpush1.msra.mxu0 0.0
    %325 = vmatprep.subr.mxu0 0.0
    %326 = vmatpush1.msra.mxu0 0.0
    %327 = vmatprep.subr.mxu0 0.0
    %328 = vmatpush1.msra.mxu0 0.0
    %329 = vmatprep.subr.mxu0 0.0
    %330 = vmatpush1.msra.mxu0 0.0
    %331 = vmatprep.subr.mxu0 0.0
    %332 = vmatpush1.msra.mxu0 0.0
    %333 = vmatprep.subr.mxu0 0.0
    %334 = vmatpush1.msra.mxu0 0.0
    %335 = vmatprep.subr.mxu0 0.0
    %336 = vmatpush1.msra.mxu0 0.0
    %337 = vmatprep.subr.mxu0 0.0
    %338 = vmatpush1.msra.mxu0 0.0
    %339 = vmatprep.subr.mxu0 0.0
    %340 = vmatpush1.msra.mxu0 0.0
    %341 = vmatprep.mubr.f32.mxu0 0.0
    %342 = vmatmul.mubr.f32.gmra.mrb[0].mxu0 %v253
    %v343 = vpop.f32.mrb[0].mxu0
    %v344 = vadd.f32 %v275, %v343
    %v345 = vpop.f32.mrb[0].mxu0
    %346 = vdwg.mxu0
    %vm347 = vcmask 64512
    %v348 = vsel %vm347, %v344, -inf
    %349 = vmax.xlane.f32.xlu0 %v348
    %v350 = vpop.xlane.xlu0 %349
    %v351 = vsub.f32 %v344, %v350
    %v352 = vmul.f32 %v351, 1.442695
    %v353 = vpow.pop %v352
    %v354 = vsel %vm347, %v353, 0.0
    %355 = vadd.xlane.f32.xlu0 %v354
    %v356 = vpop.xlane.xlu0 %355
    %v357 = vlog2.pop %v356
    %v358 = vmul.f32 %v357, 0.6931472
    %v359 = vsub.f32 %v351, %v358
    %v360 = vrcp.pop %v356
    %v361 = vmul.f32 1.0, %v360
    %v362 = vmul.f32 %v353, %v361
    %v363 = vlaneseq
    %v364 = vand.u32 %v363, 127
    %v365 = vld [vmem:[%s1] sm:$0xff]
    %366 = vset.pattern.permute.xlu0 0
    %367 = vperm.xlu0 %366, %v365
    %v368 = vpop.permute.xlu0 %367
    %vm369 = vcmp.eq.s32.totalorder %v364, %v368
    %v370 = vsel %vm369, 1, 0
    %v371 = vcvt.s32.f32 %v370
    %v372 = vmul.f32 %v371, %v359
    %v373 = vsel %vm347, %v372, 0.0
    %374 = vadd.xlane.f32.xlu0 %v373
    %v375 = vpop.xlane.xlu0 %374
    %vm376 = vcmask 7168
    %377 = vst.msk [vmem:[%s8] sm:$0xff] %vm376, %v375
    %v378 = vmul.f32 %v362, %v359
    %v379 = vsel %vm347, %v378, 0.0
    %380 = vadd.xlane.f32.xlu0 %v379
    %v381 = vpop.xlane.xlu0 %380
    %v382 = vsub.f32 0.0, %v381
    %383 = vst.msk [vmem:[%s10] sm:$0xff] %vm376, %v382
    %vm384 = vcmp.eq.s32.totalorder %v364, 8
    %v385 = vsel %vm384, %v344, 0.0
    %386 = vadd.xlane.f32.xlu0 %v385
    %v387 = vpop.xlane.xlu0 %386
    %388 = vst.msk [vmem:[%s9] sm:$0xff] %vm376, %v387
    // Predicated region
    $region46: #{actor_critic_evaluate.1} parent=1 // pred_check
      _
    $region47: #{actor_critic_evaluate.1} parent=1 // pred_check_branch
      %390 = sbr.rel (0) target = $region49
    $region48: #{actor_critic_evaluate.1} parent=1 // pred_region
      _
    $region49: #{actor_critic_evaluate.1} parent=1 // pred_fallthru
      _
    // Predicated region
    $region50: #{actor_critic_evaluate.1} parent=1 // pred_check
      _
    $region51: #{actor_critic_evaluate.1} parent=1 // pred_check_branch
      %392 = sbr.rel (0) target = $region53
    $region52: #{actor_critic_evaluate.1} parent=1 // pred_region
      _
    $region53: #{actor_critic_evaluate.1} parent=1 // pred_fallthru
      _
    // Predicated region
    $region54: #{actor_critic_evaluate.1} parent=1 // pred_check
      _
    $region55: #{actor_critic_evaluate.1} parent=1 // pred_check_branch
      %394 = sbr.rel (0) target = $region57
    $region56: #{actor_critic_evaluate.1} parent=1 // pred_region
      _
    $region57: #{actor_critic_evaluate.1} parent=1 // pred_fallthru
      _
    // Predicated region
    $region58: #{actor_critic_evaluate.1} parent=1 // pred_check
      _
    $region59: #{actor_critic_evaluate.1} parent=1 // pred_check_branch
      %396 = sbr.rel (0) target = $region61
    $region60: #{actor_critic_evaluate.1} parent=1 // pred_region
      _
    $region61: #{actor_critic_evaluate.1} parent=1 // pred_fallthru
      _
    // Predicated region
    $region62: #{actor_critic_evaluate.1} parent=1 // pred_check
      _
    $region63: #{actor_critic_evaluate.1} parent=1 // pred_check_branch
      %398 = sbr.rel (0) target = $region65
    $region64: #{actor_critic_evaluate.1} parent=1 // pred_region
      _
    $region65: #{actor_critic_evaluate.1} parent=1 // pred_fallthru
      _
    // Predicated region
    $region66: #{actor_critic_evaluate.1} parent=1 // pred_check
      _
    $region67: #{actor_critic_evaluate.1} parent=1 // pred_check_branch
      %400 = sbr.rel (0) target = $region69
    $region68: #{actor_critic_evaluate.1} parent=1 // pred_region
      _
    $region69: #{actor_critic_evaluate.1} parent=1 // pred_fallthru
      _
    %401 = vsyncpa [#allocation3], 1
    %402 = vsyncpa [#allocation5], 1

</llo_original>
